<compile_context>
chip_gen: v6e
topology: v6e:2x2x1
jax: 0.10.0
libtpu: 0.0.40
codegen_flags: <defaults>
</compile_context>

<pallas_src>
import functools

import numpy as np
import jax
import jax.numpy as jnp
from jax.experimental import pallas as pl
from jax.experimental.pallas import tpu as pltpu


def _pe_packed_kernel(times_ref, expand_ref, mult_ref, phase_ref, out_ref):
    # times_ref : (tile_r, k)       f32  -- k packed time values per output row
    # expand_ref: (k, k*out_dim)    f32  -- one-hot "repeat each time out_dim times"
    # mult_ref  : (1, k*out_dim)    f32  -- per-lane inverse timescale
    # phase_ref : (1, k*out_dim)    f32  -- 0.0 on sin lanes, pi/2 on cos lanes
    # out_ref   : (tile_r, k*out_dim) f32 -- lane-dense (128-wide) output slab
    t = jnp.dot(times_ref[...], expand_ref[...],
                preferred_element_type=jnp.float32,
                precision=jax.lax.Precision.HIGHEST)   # exact: 0/1 expand matrix
    out_ref[...] = jnp.sin(t * mult_ref[...] + phase_ref[...])


def _pe_full_kernel(times_ref, mult_ref, phase_ref, out_ref):
    # times_ref: (tile_m, 1) f32, mult/phase: (1, out_dim) f32, out: (tile_m, out_dim) f32
    out_ref[...] = jnp.sin(times_ref[...] * mult_ref[...] + phase_ref[...])


def _pick_tile(n_rows, cap):
    """Largest tile <= cap, but guarantee >= 2 grid steps for medium/large
    inputs so a 'parallel' grid axis can be sharded across both v7x TCs.
    Returned tile is either the full extent (single step) or a multiple of 8."""
    if n_rows <= 1024:
        return n_rows
    half = -(-n_rows // 2)
    half = -(-half // 8) * 8
    return min(half, cap)


def positional_encoding_tf(P_time, d_model, max_len=500, MAX=10000):
    """JAX/Pallas equivalent of PositionalEncodingTF(d_model, max_len).forward(P_time)."""
    num = d_model // 2
    if num < 1:
        raise ValueError("d_model must be >= 2")
    out_dim = 2 * num  # PyTorch module produces 2*(d_model//2) channels

    # Host-side constants (exactly as the PyTorch module builds them).
    timescales = np.power(float(max_len), np.linspace(0.0, 1.0, num))
    inv_ts = (1.0 / timescales).astype(np.float32)
    base_mult = np.concatenate([inv_ts, inv_ts]).astype(np.float32)          # (out_dim,)
    base_phase = np.concatenate([np.zeros(num, np.float32),
                                 np.full(num, np.pi / 2.0, np.float32)])     # cos(x)=sin(x+pi/2)

    P_time = P_time.astype(jnp.float32)     # mirrors the float64 -> float32 cast
    T, B = P_time.shape
    M = T * B
    times_flat = P_time.reshape(M)

    parallel = pltpu.CompilerParams(dimension_semantics=("parallel",))

    # ---- lane-packed path: d_model < 128 -> pack k rows per 128-lane output row
    k = 128 // out_dim if (out_dim < 128 and 128 % out_dim == 0) else 1
    if 1 < k <= 16:
        M_pad = -(-M // k) * k                      # pad rows instead of falling back
        if M_pad != M:
            times_flat = jnp.pad(times_flat, (0, M_pad - M))
        rows = M_pad // k
        kd = k * out_dim                            # == 128
        times2d = times_flat.reshape(rows, k)

        expand = np.zeros((k, kd), dtype=np.float32)
        for g in range(k):
            expand[g, g * out_dim:(g + 1) * out_dim] = 1.0
        mult = np.tile(base_mult, k).reshape(1, kd)
        phase = np.tile(base_phase, k).reshape(1, kd)

        # (tile_r,128) f32 output block = 2 MiB at 4096; times block pads to
        # (tile_r,128) in VMEM too, so ~8 MiB double-buffered -- safe on v7x.
        tile_r = _pick_tile(rows, 4096)

        cost = pl.CostEstimate(
            flops=2 * rows * k * kd + 2 * rows * kd,
            transcendentals=rows * kd,
            bytes_accessed=4 * (rows * kd + rows * k + k * kd + 2 * kd))

        out = pl.pallas_call(
            _pe_packed_kernel,
            out_shape=jax.ShapeDtypeStruct((rows, kd), jnp.float32),
            grid=(pl.cdiv(rows, tile_r),),
            in_specs=[
                pl.BlockSpec((tile_r, k), lambda i: (i, 0)),
                pl.BlockSpec((k, kd), lambda i: (0, 0)),
                pl.BlockSpec((1, kd), lambda i: (0, 0)),
                pl.BlockSpec((1, kd), lambda i: (0, 0)),
            ],
            out_specs=pl.BlockSpec((tile_r, kd), lambda i: (i, 0)),
            compiler_params=parallel,
            cost_estimate=cost,
        )(times2d, jnp.asarray(expand), jnp.asarray(mult), jnp.asarray(phase))
        out = out.reshape(M_pad, out_dim)[:M]       # drop throwaway pad rows
        return out.reshape(T, B, out_dim)

    # ---- general path: (M, out_dim) tiles, out_dim on lanes, single full-width store
    times2d = times_flat.reshape(M, 1)
    mult = jnp.asarray(base_mult.reshape(1, out_dim))
    phase = jnp.asarray(base_phase.reshape(1, out_dim))

    # Keep each output block around <= 2 MiB so double-buffered tiles (plus the
    # lane-padded (tile_m,1)->(tile_m,128) times block) fit default scoped VMEM
    # on every generation, including v7x.
    cap = max(8, ((2 * 1024 * 1024) // (4 * out_dim)) // 8 * 8)
    tile_m = _pick_tile(M, cap)

    cost = pl.CostEstimate(
        flops=2 * M * out_dim,
        transcendentals=M * out_dim,
        bytes_accessed=4 * (M * out_dim + M + 2 * out_dim))

    out = pl.pallas_call(
        _pe_full_kernel,
        out_shape=jax.ShapeDtypeStruct((M, out_dim), jnp.float32),
        grid=(pl.cdiv(M, tile_m),),
        in_specs=[
            pl.BlockSpec((tile_m, 1), lambda i: (i, 0)),
            pl.BlockSpec((1, out_dim), lambda i: (0, 0)),
            pl.BlockSpec((1, out_dim), lambda i: (0, 0)),
        ],
        out_specs=pl.BlockSpec((tile_m, out_dim), lambda i: (i, 0)),
        compiler_params=parallel,
        cost_estimate=cost,
    )(times2d, mult, phase)
    return out.reshape(T, B, out_dim)


if __name__ == "__main__":
    key = jax.random.PRNGKey(0)
    max_len = 500

    def reference(P_time, d_model, max_len):
        n = d_model // 2
        ts = jnp.asarray(np.power(float(max_len), np.linspace(0.0, 1.0, n)),
                         dtype=jnp.float32)
        scaled = P_time.astype(jnp.float32)[:, :, None] / ts[None, None, :]
        return jnp.concatenate([jnp.sin(scaled), jnp.cos(scaled)], axis=-1)

    cases = [
        (8, 2, 32),    # d_model < 128, M % k == 0 -> lane-packed path
        (5, 3, 32),    # d_model < 128, M % k != 0 -> lane-packed path with row padding
        (8, 2, 256),   # d_model >= 128 -> general lane-dense path
        (7, 3, 48),    # out_dim does not divide 128 -> general path
    ]
    for idx, (T, B, d_model) in enumerate(cases):
        k2 = jax.random.fold_in(key, idx)
        P_time = jax.random.uniform(k2, (T, B), dtype=jnp.float32) * 50.0

        pe = jax.block_until_ready(positional_encoding_tf(P_time, d_model, max_len=max_len))
        pe_ref = reference(P_time, d_model, max_len)

        assert pe.shape == (T, B, 2 * (d_model // 2))
        assert pe.dtype == jnp.float32
        np.testing.assert_allclose(np.asarray(pe), np.asarray(pe_ref),
                                   rtol=1e-5, atol=5e-5)

    print("KERNEL_OK")
</pallas_src>

<mosaic_0001>
module attributes {stable_mosaic.version = 11 : i64} {
  func.func @_pe_packed_kernel(%arg0: i32, %arg1: memref<4x4xf32, #tpu.memory_space<vmem>>, %arg2: memref<4x128xf32, #tpu.memory_space<vmem>>, %arg3: memref<1x128xf32, #tpu.memory_space<vmem>>, %arg4: memref<1x128xf32, #tpu.memory_space<vmem>>, %arg5: memref<4x128xf32, #tpu.memory_space<vmem>>) attributes {dimension_semantics = [#tpu.dimension_semantics<parallel>], iteration_bounds = array<i64: 1>, scalar_prefetch = 0 : i64, scratch_operands = 0 : i64, tpu.core_type = #tpu.core_type<tc>, window_params = [{transform_indices = @transform_0, window_bounds = array<i64: 4, 4>}, {pipeline_mode = #tpu.pipeline_mode<synchronous>, transform_indices = @transform_1, window_bounds = array<i64: 4, 128>}, {pipeline_mode = #tpu.pipeline_mode<synchronous>, transform_indices = @transform_2, window_bounds = array<i64: 1, 128>}, {pipeline_mode = #tpu.pipeline_mode<synchronous>, transform_indices = @transform_3, window_bounds = array<i64: 1, 128>}, {transform_indices = @transform_4, window_bounds = array<i64: 4, 128>}]} {
    %c0 = arith.constant 0 : index
    %c0_0 = arith.constant 0 : index
    %0 = vector.load %arg1[%c0, %c0_0] : memref<4x4xf32, #tpu.memory_space<vmem>>, vector<4x4xf32>
    %c0_1 = arith.constant 0 : index
    %c0_2 = arith.constant 0 : index
    %1 = vector.load %arg2[%c0_1, %c0_2] : memref<4x128xf32, #tpu.memory_space<vmem>>, vector<4x128xf32>
    %cst = arith.constant dense<0.000000e+00> : vector<4x128xf32>
    %2 = tpu.matmul %0, %1, %cst {dimension_numbers = #tpu.dot_dimension_numbers<[1], [0], [0], [1], [0, 0, 1, 1], [], []>, precision = #tpu.contract_precision<fp32>} : vector<4x4xf32>, vector<4x128xf32>, vector<4x128xf32> -> vector<4x128xf32>
    %c0_3 = arith.constant 0 : index
    %c0_4 = arith.constant 0 : index
    %3 = vector.load %arg3[%c0_3, %c0_4] : memref<1x128xf32, #tpu.memory_space<vmem>>, vector<1x128xf32>
    %4 = vector.broadcast %3 : vector<1x128xf32> to vector<4x128xf32>
    %5 = arith.mulf %2, %4 : vector<4x128xf32>
    %c0_5 = arith.constant 0 : index
    %c0_6 = arith.constant 0 : index
    %6 = vector.load %arg4[%c0_5, %c0_6] : memref<1x128xf32, #tpu.memory_space<vmem>>, vector<1x128xf32>
    %7 = vector.broadcast %6 : vector<1x128xf32> to vector<4x128xf32>
    %8 = arith.addf %5, %7 : vector<4x128xf32>
    %9 = math.sin %8 : vector<4x128xf32>
    %c0_7 = arith.constant 0 : index
    %c0_8 = arith.constant 0 : index
    %10 = vector.load %arg5[%c0_7, %c0_8] : memref<4x128xf32, #tpu.memory_space<vmem>>, vector<4x128xf32>
    tpu.vector_store %arg5[%c0_7, %c0_8], %9 {strides = array<i32>} : memref<4x128xf32, #tpu.memory_space<vmem>>, vector<4x128xf32>,
    return
  }
  func.func @transform_0(%arg0: i32) -> (i32, i32) {
    %c0_i32 = arith.constant 0 : i32
    %c0_i32_0 = arith.constant 0 : i32
    return %arg0, %c0_i32 : i32, i32
  }
  func.func @transform_1(%arg0: i32) -> (i32, i32) {
    %c0_i32 = arith.constant 0 : i32
    %c0_i32_0 = arith.constant 0 : i32
    %c0_i32_1 = arith.constant 0 : i32
    return %c0_i32, %c0_i32_0 : i32, i32
  }
  func.func @transform_2(%arg0: i32) -> (i32, i32) {
    %c0_i32 = arith.constant 0 : i32
    %c0_i32_0 = arith.constant 0 : i32
    %c0_i32_1 = arith.constant 0 : i32
    return %c0_i32, %c0_i32_0 : i32, i32
  }
  func.func @transform_3(%arg0: i32) -> (i32, i32) {
    %c0_i32 = arith.constant 0 : i32
    %c0_i32_0 = arith.constant 0 : i32
    %c0_i32_1 = arith.constant 0 : i32
    return %c0_i32, %c0_i32_0 : i32, i32
  }
  func.func @transform_4(%arg0: i32) -> (i32, i32) {
    %c0_i32 = arith.constant 0 : i32
    %c0_i32_0 = arith.constant 0 : i32
    return %arg0, %c0_i32 : i32, i32
  }
}

</mosaic_0001>

<llo_original>
// kernel: tpu_custom_call.1
$region0: #{tpu_custom_call.1}
  #allocation0 [shape = 'u32[]', space=smem, size = 0x4, offset = 0x4, fixed_abs, tag = 'smem constant byte address 0x4 - core index']
  #allocation1 [shape = 'u32[144,128]{1,0:T(1,128)}', space=vmem, size = 0x12000, scoped, tag = 'internal scratch']
  %s0 = inlined_call_operand.hbm [shape: f32[4,4], index: 0, kind: input, shape index: {}]
  %s1 = inlined_call_operand.hbm [shape: f32[4,128], index: 1, kind: input, shape index: {}]
  %s2 = inlined_call_operand.vmem [shape: f32[1,128], index: 2, kind: input, shape index: {}]
  %s3 = inlined_call_operand.vmem [shape: f32[1,128], index: 3, kind: input, shape index: {}]
  %s4 = inlined_call_operand.hbm [shape: f32[4,128], index: 4, kind: output, shape index: {}]
  %s5 = sld [smem:[#allocation0]]
  $region34: #{tpu_custom_call.1} parent=0
    _
  %s7 = ssub.s32 1, %s5
  %s8 = scalar_select 0, %s7, %s5
  $region1: #{tpu_custom_call.1} parent=0
    #allocation2 [shape = 'u8[2048]{0}', space=vmem, size = 0x800, scoped, tag = 'input window, operand 0, single buffered']
    #allocation3 [shape = 's32[1]{0}', space=sflag, size = 0x4, scoped, tag = 'scoped memory for tpu_custom_call.1']
    #allocation4 [shape = 's32[1]{0}', space=sflag, size = 0x4, scoped, tag = 'scoped memory for tpu_custom_call.1']
    #allocation5 [shape = 'u8[2048]{0}', space=vmem, size = 0x800, scoped, tag = 'input window, operand 1, single buffered']
    #allocation6 [shape = 's32[1]{0}', space=sflag, size = 0x4, scoped, tag = 'scoped memory for tpu_custom_call.1']
    #allocation7 [shape = 'u8[2048]{0}', space=vmem, size = 0x800, scoped, tag = 'output window, operand 0, single buffered']
    %9 = vsyncpa [#allocation3], 0
    %10 = vsyncpa [#allocation6], 0
    %11 = vsyncpa [#allocation4], 0
    // Predicated region
    $region2: #{tpu_custom_call.1} parent=1 // pred_check
      _
    $region3: #{tpu_custom_call.1} parent=1 // pred_check_branch
      %13 = sbr.rel (0) target = $region5
    $region4: #{tpu_custom_call.1} parent=1 // pred_region
      %s15 = ssub.s32 64, 64
      %16 = vsyncadd [#allocation3], %s15
      %s18 = sshll.u32 [#allocation2], 4
      %s19 = int_to_ptr.vmem [resolvable:$true] %s18
      %21 = dma.hbm_to_vmem [thread:$0]  %s0, 64, %s19, [#allocation3]
    $region5: #{tpu_custom_call.1} parent=1 // pred_fallthru
      _
    // Predicated region
    $region6: #{tpu_custom_call.1} parent=1 // pred_check
      _
    $region7: #{tpu_custom_call.1} parent=1 // pred_check_branch
      %23 = sbr.rel (0) target = $region9
    $region8: #{tpu_custom_call.1} parent=1 // pred_region
      %s25 = ssub.s32 64, 64
      %26 = vsyncadd [#allocation6], %s25
      %s28 = sshll.u32 [#allocation5], 4
      %s29 = int_to_ptr.vmem [resolvable:$true] %s28
      %31 = dma.hbm_to_vmem [thread:$0]  %s1, 64, %s29, [#allocation6]
    $region9: #{tpu_custom_call.1} parent=1 // pred_fallthru
      _
    // Predicated region
    $region10: #{tpu_custom_call.1} parent=1 // pred_check
      _
    $region11: #{tpu_custom_call.1} parent=1 // pred_check_branch
      %33 = sbr.rel (0) target = $region13
    $region12: #{tpu_custom_call.1} parent=1 // pred_region
      _
    $region13: #{tpu_custom_call.1} parent=1 // pred_fallthru
      _
    // Predicated region
    $region14: #{tpu_custom_call.1} parent=1 // pred_check
      _
    $region15: #{tpu_custom_call.1} parent=1 // pred_check_branch
      %35 = sbr.rel (0) target = $region17
    $region16: #{tpu_custom_call.1} parent=1 // pred_region
      _
    $region17: #{tpu_custom_call.1} parent=1 // pred_fallthru
      _
    // Predicated region
    $region18: #{tpu_custom_call.1} parent=1 // pred_check
      _
    $region19: #{tpu_custom_call.1} parent=1 // pred_check_branch
      %37 = sbr.rel (0) target = $region21
    $region20: #{tpu_custom_call.1} parent=1 // pred_region
      %38 = dma.done [#allocation3], 64
    $region21: #{tpu_custom_call.1} parent=1 // pred_fallthru
      _
    // Predicated region
    $region22: #{tpu_custom_call.1} parent=1 // pred_check
      _
    $region23: #{tpu_custom_call.1} parent=1 // pred_check_branch
      %40 = sbr.rel (0) target = $region25
    $region24: #{tpu_custom_call.1} parent=1 // pred_region
      %41 = dma.done [#allocation6], 64
    $region25: #{tpu_custom_call.1} parent=1 // pred_fallthru
      _
    %v42 = vld [vmem:[#allocation2] sm:$0xf]
    %v43 = vld [vmem:[#allocation5] sm:$0xf]
    %vm44 = vcmask 31744
    %v46 = vsel %vm44, %v42, 0
    %vm48 = vcmask 1043456
    %v50 = vsel %vm48, %v43, 0
    %52 = vmatprep.subr.mxu0 0.0
    %53 = vmatpush1.msra.mxu0 0.0
    %54 = vmatprep.subr.mxu0 0.0
    %55 = vmatpush1.msra.mxu0 0.0
    %56 = vmatprep.subr.mxu0 0.0
    %57 = vmatpush1.msra.mxu0 0.0
    %58 = vmatprep.subr.mxu0 0.0
    %59 = vmatpush1.msra.mxu0 0.0
    %60 = vmatprep.subr.mxu0 0.0
    %61 = vmatpush1.msra.mxu0 0.0
    %62 = vmatprep.subr.mxu0 0.0
    %63 = vmatpush1.msra.mxu0 0.0
    %64 = vmatprep.subr.mxu0 0.0
    %65 = vmatpush1.msra.mxu0 0.0
    %66 = vmatprep.subr.mxu0 0.0
    %67 = vmatpush1.msra.mxu0 0.0
    %68 = vmatprep.subr.mxu0 0.0
    %69 = vmatpush1.msra.mxu0 0.0
    %70 = vmatprep.subr.mxu0 0.0
    %71 = vmatpush1.msra.mxu0 0.0
    %72 = vmatprep.subr.mxu0 0.0
    %73 = vmatpush1.msra.mxu0 0.0
    %74 = vmatprep.subr.mxu0 0.0
    %75 = vmatpush1.msra.mxu0 0.0
    %76 = vmatprep.subr.mxu0 0.0
    %77 = vmatpush1.msra.mxu0 0.0
    %78 = vmatprep.subr.mxu0 0.0
    %79 = vmatpush1.msra.mxu0 0.0
    %80 = vmatprep.subr.mxu0 0.0
    %81 = vmatpush1.msra.mxu0 0.0
    %82 = vmatprep.subr.mxu0 0.0
    %v83 = vand.u32 %v50, 4294901760
    %84 = vmatpush1.msra.mxu0 %v83
    %85 = vmatprep.subr.mxu0 0.0
    %86 = vmatpush2.msra.mxu0 0.0
    %87 = vmatprep.subr.mxu0 0.0
    %88 = vmatpush2.msra.mxu0 0.0
    %89 = vmatprep.subr.mxu0 0.0
    %90 = vmatpush2.msra.mxu0 0.0
    %91 = vmatprep.subr.mxu0 0.0
    %92 = vmatpush2.msra.mxu0 0.0
    %93 = vmatprep.subr.mxu0 0.0
    %94 = vmatpush2.msra.mxu0 0.0
    %95 = vmatprep.subr.mxu0 0.0
    %96 = vmatpush2.msra.mxu0 0.0
    %97 = vmatprep.subr.mxu0 0.0
    %98 = vmatpush2.msra.mxu0 0.0
    %99 = vmatprep.subr.mxu0 0.0
    %100 = vmatpush2.msra.mxu0 0.0
    %101 = vmatprep.subr.mxu0 0.0
    %102 = vmatpush2.msra.mxu0 0.0
    %103 = vmatprep.subr.mxu0 0.0
    %104 = vmatpush2.msra.mxu0 0.0
    %105 = vmatprep.subr.mxu0 0.0
    %106 = vmatpush2.msra.mxu0 0.0
    %107 = vmatprep.subr.mxu0 0.0
    %108 = vmatpush2.msra.mxu0 0.0
    %109 = vmatprep.subr.mxu0 0.0
    %110 = vmatpush2.msra.mxu0 0.0
    %111 = vmatprep.subr.mxu0 0.0
    %112 = vmatpush2.msra.mxu0 0.0
    %113 = vmatprep.subr.mxu0 0.0
    %114 = vmatpush2.msra.mxu0 0.0
    %115 = vmatprep.subr.mxu0 0.0
    %116 = vmatpush2.msra.mxu0 0.0
    %117 = vmatprep.mubr.f32.mxu0 0.0
    %v118 = vand.u32 %v46, 4294901760
    %v119 = vsub.f32 %v46, %v118
    %v120 = vand.u32 %v119, 4294901760
    %v121 = vsub.f32 %v119, %v120
    %v122 = vand.u32 %v121, 4294901760
    %123 = vmatmul.mubr.f32.gmra.mxu0 %v122
    %v124 = vpop.f32.mrf.mxu0
    %v125 = vadd.f32 0.0, %v124
    %v126 = vpop.f32.mrf.mxu0
    %127 = vdwg.mxu0
    %128 = vmatprep.subr.mxu0 0.0
    %129 = vmatpush1.msra.mxu0 0.0
    %130 = vmatprep.subr.mxu0 0.0
    %131 = vmatpush1.msra.mxu0 0.0
    %132 = vmatprep.subr.mxu0 0.0
    %133 = vmatpush1.msra.mxu0 0.0
    %134 = vmatprep.subr.mxu0 0.0
    %135 = vmatpush1.msra.mxu0 0.0
    %136 = vmatprep.subr.mxu0 0.0
    %137 = vmatpush1.msra.mxu0 0.0
    %138 = vmatprep.subr.mxu0 0.0
    %139 = vmatpush1.msra.mxu0 0.0
    %140 = vmatprep.subr.mxu0 0.0
    %141 = vmatpush1.msra.mxu0 0.0
    %142 = vmatprep.subr.mxu0 0.0
    %143 = vmatpush1.msra.mxu0 0.0
    %144 = vmatprep.subr.mxu0 0.0
    %145 = vmatpush1.msra.mxu0 0.0
    %146 = vmatprep.subr.mxu0 0.0
    %147 = vmatpush1.msra.mxu0 0.0
    %148 = vmatprep.subr.mxu0 0.0
    %149 = vmatpush1.msra.mxu0 0.0
    %150 = vmatprep.subr.mxu0 0.0
    %151 = vmatpush1.msra.mxu0 0.0
    %152 = vmatprep.subr.mxu0 0.0
    %153 = vmatpush1.msra.mxu0 0.0
    %154 = vmatprep.subr.mxu0 0.0
    %155 = vmatpush1.msra.mxu0 0.0
    %156 = vmatprep.subr.mxu0 0.0
    %157 = vmatpush1.msra.mxu0 0.0
    %158 = vmatprep.subr.mxu0 0.0
    %v159 = vand.u32 %v50, 4294901760
    %v160 = vsub.f32 %v50, %v159
    %v161 = vand.u32 %v160, 4294901760
    %v162 = vsub.f32 %v160, %v161
    %v163 = vand.u32 %v162, 4294901760
    %164 = vmatpush1.msra.mxu0 %v163
    %165 = vmatprep.subr.mxu0 0.0
    %166 = vmatpush2.msra.mxu0 0.0
    %167 = vmatprep.subr.mxu0 0.0
    %168 = vmatpush2.msra.mxu0 0.0
    %169 = vmatprep.subr.mxu0 0.0
    %170 = vmatpush2.msra.mxu0 0.0
    %171 = vmatprep.subr.mxu0 0.0
    %172 = vmatpush2.msra.mxu0 0.0
    %173 = vmatprep.subr.mxu0 0.0
    %174 = vmatpush2.msra.mxu0 0.0
    %175 = vmatprep.subr.mxu0 0.0
    %176 = vmatpush2.msra.mxu0 0.0
    %177 = vmatprep.subr.mxu0 0.0
    %178 = vmatpush2.msra.mxu0 0.0
    %179 = vmatprep.subr.mxu0 0.0
    %180 = vmatpush2.msra.mxu0 0.0
    %181 = vmatprep.subr.mxu0 0.0
    %182 = vmatpush2.msra.mxu0 0.0
    %183 = vmatprep.subr.mxu0 0.0
    %184 = vmatpush2.msra.mxu0 0.0
    %185 = vmatprep.subr.mxu0 0.0
    %186 = vmatpush2.msra.mxu0 0.0
    %187 = vmatprep.subr.mxu0 0.0
    %188 = vmatpush2.msra.mxu0 0.0
    %189 = vmatprep.subr.mxu0 0.0
    %190 = vmatpush2.msra.mxu0 0.0
    %191 = vmatprep.subr.mxu0 0.0
    %192 = vmatpush2.msra.mxu0 0.0
    %193 = vmatprep.subr.mxu0 0.0
    %194 = vmatpush2.msra.mxu0 0.0
    %195 = vmatprep.subr.mxu0 0.0
    %196 = vmatpush2.msra.mxu0 0.0
    %197 = vmatprep.mubr.f32.mxu0 0.0
    %v198 = vand.u32 %v46, 4294901760
    %199 = vmatmul.mubr.f32.gmra.mxu0 %v198
    %v200 = vpop.f32.mrf.mxu0
    %v201 = vadd.f32 %v125, %v200
    %v202 = vpop.f32.mrf.mxu0
    %203 = vdwg.mxu0
    %204 = vmatprep.subr.mxu0 0.0
    %205 = vmatpush1.msra.mxu0 0.0
    %206 = vmatprep.subr.mxu0 0.0
    %207 = vmatpush1.msra.mxu0 0.0
    %208 = vmatprep.subr.mxu0 0.0
    %209 = vmatpush1.msra.mxu0 0.0
    %210 = vmatprep.subr.mxu0 0.0
    %211 = vmatpush1.msra.mxu0 0.0
    %212 = vmatprep.subr.mxu0 0.0
    %213 = vmatpush1.msra.mxu0 0.0
    %214 = vmatprep.subr.mxu0 0.0
    %215 = vmatpush1.msra.mxu0 0.0
    %216 = vmatprep.subr.mxu0 0.0
    %217 = vmatpush1.msra.mxu0 0.0
    %218 = vmatprep.subr.mxu0 0.0
    %219 = vmatpush1.msra.mxu0 0.0
    %220 = vmatprep.subr.mxu0 0.0
    %221 = vmatpush1.msra.mxu0 0.0
    %222 = vmatprep.subr.mxu0 0.0
    %223 = vmatpush1.msra.mxu0 0.0
    %224 = vmatprep.subr.mxu0 0.0
    %225 = vmatpush1.msra.mxu0 0.0
    %226 = vmatprep.subr.mxu0 0.0
    %227 = vmatpush1.msra.mxu0 0.0
    %228 = vmatprep.subr.mxu0 0.0
    %229 = vmatpush1.msra.mxu0 0.0
    %230 = vmatprep.subr.mxu0 0.0
    %231 = vmatpush1.msra.mxu0 0.0
    %232 = vmatprep.subr.mxu0 0.0
    %233 = vmatpush1.msra.mxu0 0.0
    %234 = vmatprep.subr.mxu0 0.0
    %v235 = vand.u32 %v50, 4294901760
    %v236 = vsub.f32 %v50, %v235
    %237 = vmatpush1.msra.mxu0 %v236
    %238 = vmatprep.subr.mxu0 0.0
    %239 = vmatpush2.msra.mxu0 0.0
    %240 = vmatprep.subr.mxu0 0.0
    %241 = vmatpush2.msra.mxu0 0.0
    %242 = vmatprep.subr.mxu0 0.0
    %243 = vmatpush2.msra.mxu0 0.0
    %244 = vmatprep.subr.mxu0 0.0
    %245 = vmatpush2.msra.mxu0 0.0
    %246 = vmatprep.subr.mxu0 0.0
    %247 = vmatpush2.msra.mxu0 0.0
    %248 = vmatprep.subr.mxu0 0.0
    %249 = vmatpush2.msra.mxu0 0.0
    %250 = vmatprep.subr.mxu0 0.0
    %251 = vmatpush2.msra.mxu0 0.0
    %252 = vmatprep.subr.mxu0 0.0
    %253 = vmatpush2.msra.mxu0 0.0
    %254 = vmatprep.subr.mxu0 0.0
    %255 = vmatpush2.msra.mxu0 0.0
    %256 = vmatprep.subr.mxu0 0.0
    %257 = vmatpush2.msra.mxu0 0.0
    %258 = vmatprep.subr.mxu0 0.0
    %259 = vmatpush2.msra.mxu0 0.0
    %260 = vmatprep.subr.mxu0 0.0
    %261 = vmatpush2.msra.mxu0 0.0
    %262 = vmatprep.subr.mxu0 0.0
    %263 = vmatpush2.msra.mxu0 0.0
    %264 = vmatprep.subr.mxu0 0.0
    %265 = vmatpush2.msra.mxu0 0.0
    %266 = vmatprep.subr.mxu0 0.0
    %267 = vmatpush2.msra.mxu0 0.0
    %268 = vmatprep.subr.mxu0 0.0
    %269 = vmatpush2.msra.mxu0 0.0
    %270 = vmatprep.mubr.f32.mxu0 0.0
    %v271 = vand.u32 %v46, 4294901760
    %v272 = vsub.f32 %v46, %v271
    %273 = vmatmul.mubr.f32.gmra.mxu0 %v272
    %v274 = vpop.f32.mrf.mxu0
    %v275 = vadd.f32 %v201, %v274
    %v276 = vpop.f32.mrf.mxu0
    %277 = vdwg.mxu0
    %278 = vmatprep.subr.mxu0 0.0
    %279 = vmatpush1.msra.mxu0 0.0
    %280 = vmatprep.subr.mxu0 0.0
    %281 = vmatpush1.msra.mxu0 0.0
    %282 = vmatprep.subr.mxu0 0.0
    %283 = vmatpush1.msra.mxu0 0.0
    %284 = vmatprep.subr.mxu0 0.0
    %285 = vmatpush1.msra.mxu0 0.0
    %286 = vmatprep.subr.mxu0 0.0
    %287 = vmatpush1.msra.mxu0 0.0
    %288 = vmatprep.subr.mxu0 0.0
    %289 = vmatpush1.msra.mxu0 0.0
    %290 = vmatprep.subr.mxu0 0.0
    %291 = vmatpush1.msra.mxu0 0.0
    %292 = vmatprep.subr.mxu0 0.0
    %293 = vmatpush1.msra.mxu0 0.0
    %294 = vmatprep.subr.mxu0 0.0
    %295 = vmatpush1.msra.mxu0 0.0
    %296 = vmatprep.subr.mxu0 0.0
    %297 = vmatpush1.msra.mxu0 0.0
    %298 = vmatprep.subr.mxu0 0.0
    %299 = vmatpush1.msra.mxu0 0.0
    %300 = vmatprep.subr.mxu0 0.0
    %301 = vmatpush1.msra.mxu0 0.0
    %302 = vmatprep.subr.mxu0 0.0
    %303 = vmatpush1.msra.mxu0 0.0
    %304 = vmatprep.subr.mxu0 0.0
    %305 = vmatpush1.msra.mxu0 0.0
    %306 = vmatprep.subr.mxu0 0.0
    %307 = vmatpush1.msra.mxu0 0.0
    %308 = vmatprep.subr.mxu0 0.0
    %v309 = vand.u32 %v50, 4294901760
    %310 = vmatpush1.msra.mxu0 %v309
    %311 = vmatprep.subr.mxu0 0.0
    %312 = vmatpush2.msra.mxu0 0.0
    %313 = vmatprep.subr.mxu0 0.0
    %314 = vmatpush2.msra.mxu0 0.0
    %315 = vmatprep.subr.mxu0 0.0
    %316 = vmatpush2.msra.mxu0 0.0
    %317 = vmatprep.subr.mxu0 0.0
    %318 = vmatpush2.msra.mxu0 0.0
    %319 = vmatprep.subr.mxu0 0.0
    %320 = vmatpush2.msra.mxu0 0.0
    %321 = vmatprep.subr.mxu0 0.0
    %322 = vmatpush2.msra.mxu0 0.0
    %323 = vmatprep.subr.mxu0 0.0
    %324 = vmatpush2.msra.mxu0 0.0
    %325 = vmatprep.subr.mxu0 0.0
    %326 = vmatpush2.msra.mxu0 0.0
    %327 = vmatprep.subr.mxu0 0.0
    %328 = vmatpush2.msra.mxu0 0.0
    %329 = vmatprep.subr.mxu0 0.0
    %330 = vmatpush2.msra.mxu0 0.0
    %331 = vmatprep.subr.mxu0 0.0
    %332 = vmatpush2.msra.mxu0 0.0
    %333 = vmatprep.subr.mxu0 0.0
    %334 = vmatpush2.msra.mxu0 0.0
    %335 = vmatprep.subr.mxu0 0.0
    %336 = vmatpush2.msra.mxu0 0.0
    %337 = vmatprep.subr.mxu0 0.0
    %338 = vmatpush2.msra.mxu0 0.0
    %339 = vmatprep.subr.mxu0 0.0
    %340 = vmatpush2.msra.mxu0 0.0
    %341 = vmatprep.subr.mxu0 0.0
    %342 = vmatpush2.msra.mxu0 0.0
    %343 = vmatprep.mubr.f32.mxu0 0.0
    %v344 = vand.u32 %v46, 4294901760
    %v345 = vsub.f32 %v46, %v344
    %v346 = vand.u32 %v345, 4294901760
    %347 = vmatmul.mubr.f32.gmra.mxu0 %v346
    %v348 = vpop.f32.mrf.mxu0
    %v349 = vadd.f32 %v275, %v348
    %v350 = vpop.f32.mrf.mxu0
    %351 = vdwg.mxu0
    %352 = vmatprep.subr.mxu0 0.0
    %353 = vmatpush1.msra.mxu0 0.0
    %354 = vmatprep.subr.mxu0 0.0
    %355 = vmatpush1.msra.mxu0 0.0
    %356 = vmatprep.subr.mxu0 0.0
    %357 = vmatpush1.msra.mxu0 0.0
    %358 = vmatprep.subr.mxu0 0.0
    %359 = vmatpush1.msra.mxu0 0.0
    %360 = vmatprep.subr.mxu0 0.0
    %361 = vmatpush1.msra.mxu0 0.0
    %362 = vmatprep.subr.mxu0 0.0
    %363 = vmatpush1.msra.mxu0 0.0
    %364 = vmatprep.subr.mxu0 0.0
    %365 = vmatpush1.msra.mxu0 0.0
    %366 = vmatprep.subr.mxu0 0.0
    %367 = vmatpush1.msra.mxu0 0.0
    %368 = vmatprep.subr.mxu0 0.0
    %369 = vmatpush1.msra.mxu0 0.0
    %370 = vmatprep.subr.mxu0 0.0
    %371 = vmatpush1.msra.mxu0 0.0
    %372 = vmatprep.subr.mxu0 0.0
    %373 = vmatpush1.msra.mxu0 0.0
    %374 = vmatprep.subr.mxu0 0.0
    %375 = vmatpush1.msra.mxu0 0.0
    %376 = vmatprep.subr.mxu0 0.0
    %377 = vmatpush1.msra.mxu0 0.0
    %378 = vmatprep.subr.mxu0 0.0
    %379 = vmatpush1.msra.mxu0 0.0
    %380 = vmatprep.subr.mxu0 0.0
    %381 = vmatpush1.msra.mxu0 0.0
    %382 = vmatprep.subr.mxu0 0.0
    %v383 = vand.u32 %v50, 4294901760
    %v384 = vsub.f32 %v50, %v383
    %v385 = vand.u32 %v384, 4294901760
    %386 = vmatpush1.msra.mxu0 %v385
    %387 = vmatprep.subr.mxu0 0.0
    %388 = vmatpush2.msra.mxu0 0.0
    %389 = vmatprep.subr.mxu0 0.0
    %390 = vmatpush2.msra.mxu0 0.0
    %391 = vmatprep.subr.mxu0 0.0
    %392 = vmatpush2.msra.mxu0 0.0
    %393 = vmatprep.subr.mxu0 0.0
    %394 = vmatpush2.msra.mxu0 0.0
    %395 = vmatprep.subr.mxu0 0.0
    %396 = vmatpush2.msra.mxu0 0.0
    %397 = vmatprep.subr.mxu0 0.0
    %398 = vmatpush2.msra.mxu0 0.0
    %399 = vmatprep.subr.mxu0 0.0
    %400 = vmatpush2.msra.mxu0 0.0
    %401 = vmatprep.subr.mxu0 0.0
    %402 = vmatpush2.msra.mxu0 0.0
    %403 = vmatprep.subr.mxu0 0.0
    %404 = vmatpush2.msra.mxu0 0.0
    %405 = vmatprep.subr.mxu0 0.0
    %406 = vmatpush2.msra.mxu0 0.0
    %407 = vmatprep.subr.mxu0 0.0
    %408 = vmatpush2.msra.mxu0 0.0
    %409 = vmatprep.subr.mxu0 0.0
    %410 = vmatpush2.msra.mxu0 0.0
    %411 = vmatprep.subr.mxu0 0.0
    %412 = vmatpush2.msra.mxu0 0.0
    %413 = vmatprep.subr.mxu0 0.0
    %414 = vmatpush2.msra.mxu0 0.0
    %415 = vmatprep.subr.mxu0 0.0
    %416 = vmatpush2.msra.mxu0 0.0
    %417 = vmatprep.subr.mxu0 0.0
    %418 = vmatpush2.msra.mxu0 0.0
    %419 = vmatprep.mubr.f32.mxu0 0.0
    %v420 = vand.u32 %v46, 4294901760
    %421 = vmatmul.mubr.f32.gmra.mxu0 %v420
    %v422 = vpop.f32.mrf.mxu0
    %v423 = vadd.f32 %v349, %v422
    %v424 = vpop.f32.mrf.mxu0
    %425 = vdwg.mxu0
    %426 = vmatprep.subr.mxu0 0.0
    %427 = vmatpush1.msra.mxu0 0.0
    %428 = vmatprep.subr.mxu0 0.0
    %429 = vmatpush1.msra.mxu0 0.0
    %430 = vmatprep.subr.mxu0 0.0
    %431 = vmatpush1.msra.mxu0 0.0
    %432 = vmatprep.subr.mxu0 0.0
    %433 = vmatpush1.msra.mxu0 0.0
    %434 = vmatprep.subr.mxu0 0.0
    %435 = vmatpush1.msra.mxu0 0.0
    %436 = vmatprep.subr.mxu0 0.0
    %437 = vmatpush1.msra.mxu0 0.0
    %438 = vmatprep.subr.mxu0 0.0
    %439 = vmatpush1.msra.mxu0 0.0
    %440 = vmatprep.subr.mxu0 0.0
    %441 = vmatpush1.msra.mxu0 0.0
    %442 = vmatprep.subr.mxu0 0.0
    %443 = vmatpush1.msra.mxu0 0.0
    %444 = vmatprep.subr.mxu0 0.0
    %445 = vmatpush1.msra.mxu0 0.0
    %446 = vmatprep.subr.mxu0 0.0
    %447 = vmatpush1.msra.mxu0 0.0
    %448 = vmatprep.subr.mxu0 0.0
    %449 = vmatpush1.msra.mxu0 0.0
    %450 = vmatprep.subr.mxu0 0.0
    %451 = vmatpush1.msra.mxu0 0.0
    %452 = vmatprep.subr.mxu0 0.0
    %453 = vmatpush1.msra.mxu0 0.0
    %454 = vmatprep.subr.mxu0 0.0
    %455 = vmatpush1.msra.mxu0 0.0
    %456 = vmatprep.subr.mxu0 0.0
    %v457 = vand.u32 %v50, 4294901760
    %458 = vmatpush1.msra.mxu0 %v457
    %459 = vmatprep.subr.mxu0 0.0
    %460 = vmatpush2.msra.mxu0 0.0
    %461 = vmatprep.subr.mxu0 0.0
    %462 = vmatpush2.msra.mxu0 0.0
    %463 = vmatprep.subr.mxu0 0.0
    %464 = vmatpush2.msra.mxu0 0.0
    %465 = vmatprep.subr.mxu0 0.0
    %466 = vmatpush2.msra.mxu0 0.0
    %467 = vmatprep.subr.mxu0 0.0
    %468 = vmatpush2.msra.mxu0 0.0
    %469 = vmatprep.subr.mxu0 0.0
    %470 = vmatpush2.msra.mxu0 0.0
    %471 = vmatprep.subr.mxu0 0.0
    %472 = vmatpush2.msra.mxu0 0.0
    %473 = vmatprep.subr.mxu0 0.0
    %474 = vmatpush2.msra.mxu0 0.0
    %475 = vmatprep.subr.mxu0 0.0
    %476 = vmatpush2.msra.mxu0 0.0
    %477 = vmatprep.subr.mxu0 0.0
    %478 = vmatpush2.msra.mxu0 0.0
    %479 = vmatprep.subr.mxu0 0.0
    %480 = vmatpush2.msra.mxu0 0.0
    %481 = vmatprep.subr.mxu0 0.0
    %482 = vmatpush2.msra.mxu0 0.0
    %483 = vmatprep.subr.mxu0 0.0
    %484 = vmatpush2.msra.mxu0 0.0
    %485 = vmatprep.subr.mxu0 0.0
    %486 = vmatpush2.msra.mxu0 0.0
    %487 = vmatprep.subr.mxu0 0.0
    %488 = vmatpush2.msra.mxu0 0.0
    %489 = vmatprep.subr.mxu0 0.0
    %490 = vmatpush2.msra.mxu0 0.0
    %491 = vmatprep.mubr.f32.mxu0 0.0
    %v492 = vand.u32 %v46, 4294901760
    %493 = vmatmul.mubr.f32.gmra.mxu0 %v492
    %v494 = vpop.f32.mrf.mxu0
    %v495 = vadd.f32 %v423, %v494
    %v496 = vpop.f32.mrf.mxu0
    %497 = vdwg.mxu0
    %v498 = vld [vmem:[%s2] sm:$0x1]
    %v500 = vlaneseq
    %v501 = vshrl.u32 %v500, 7
    %v502 = vsub.s32 0, %v501
    %v503 = vrot.slane %v498, %v502
    %v505 = vmul.f32 %v495, %v503
    %v506 = vld [vmem:[%s3] sm:$0x1]
    %v508 = vlaneseq
    %v509 = vshrl.u32 %v508, 7
    %v510 = vsub.s32 0, %v509
    %v511 = vrot.slane %v506, %v510
    %v513 = vadd.f32 %v505, %v511
    %v514 = vand.u32 2147483647, %v513
    %vm515 = vcmp.le.f32.partialorder %v514, 0.7853982
    %vm516 = vcmp.lt.s32.totalorder %v513, 0
    %v517 = vand.u32 %v513, 2139095040
    %v518 = vshrl.u32 %v517, 23
    %v519 = vsub.s32 %v518, 127
    %v520 = vand.u32 2147483647, %v513
    %v521 = vand.u32 %v520, 8388607
    %v522 = vor.u32 %v521, 8388608
    %v523 = vsub.s32 0, %v522
    %v524 = vadd.s32 %v519, 1
    %vm525 = vcmp.gt.s32.totalorder %v524, 0
    %v526 = vsel %vm525, %v524, 0
    %v527 = vshrl.u32 %v526, 5
    %v528 = vand.u32 %v526, 31
    %v529 = vsub.s32 32, %v528
    %v530 = vshrl.u32 683565275, %v529
    %v531 = vshll.u32 683565275, %v528
    %v532 = vshrl.u32 2475754826, %v529
    %v533 = vor.u32 %v531, %v532
    %v534 = vshll.u32 2475754826, %v528
    %v535 = vshrl.u32 2131351028, %v529
    %v536 = vor.u32 %v534, %v535
    %v537 = vshll.u32 2131351028, %v528
    %v538 = vshrl.u32 2102212464, %v529
    %v539 = vor.u32 %v537, %v538
    %v540 = vshll.u32 2102212464, %v528
    %v541 = vshrl.u32 920167782, %v529
    %v542 = vor.u32 %v540, %v541
    %v543 = vshll.u32 920167782, %v528
    %v544 = vshrl.u32 1326507024, %v529
    %v545 = vor.u32 %v543, %v544
    %vm546 = vcmp.lt.s32.totalorder %v527, 1
    %vm547 = vcmp.lt.s32.totalorder %v527, 2
    %vm548 = vcmp.lt.s32.totalorder %v527, 3
    %vm549 = vcmp.lt.s32.totalorder %v527, 4
    %v550 = vsel %vm546, %v530, %v533
    %v551 = vsel %vm549, %v539, 2102212464
    %v552 = vsel %vm548, %v536, %v551
    %v553 = vsel %vm547, %v550, %v552
    %v554 = vsel %vm546, %v533, %v536
    %v555 = vsel %vm549, %v542, 920167782
    %v556 = vsel %vm548, %v539, %v555
    %v557 = vsel %vm547, %v554, %v556
    %v558 = vsel %vm546, %v536, %v539
    %v559 = vsel %vm549, %v545, 1326507024
    %v560 = vsel %vm548, %v542, %v559
    %v561 = vsel %vm547, %v558, %v560
    %v562 = vshll.u32 %v522, 8
    %v563 = vmul.u32.u64.compose %v562, %v561
    %v564 = vextract.low.u32 %v563
    %v565 = vextract.high.u32 %v563
    %v566 = vmul.u32.u64.compose %v562, %v557
    %v567 = vextract.low.u32 %v566
    %v568 = vextract.high.u32 %v566
    %v569 = vmul.u32 %v562, %v553
    %v570 = vadd.s32 %v565, %v567
    %vm571 = vc.u32 %v565, %v567
    %v572 = vadd.s32 %v568, 1
    %v573 = vsel %vm571, %v572, %v568
    %v574 = vadd.s32 %v569, %v573
    %v575 = vadd.s32 %v574, 536870912
    %v576 = vshrl.u32 %v575, 30
    %v577 = vshll.u32 %v576, 30
    %v578 = vsub.s32 %v574, %v577
    %vm579 = vcmp.lt.s32.totalorder %v578, 0
    %v580 = vsub.s32 0, %v578
    %v581 = vsel %vm579, %v580, %v578
    %v582 = vclz %v581
    %v583 = vsub.s32 %v582, 2
    %vm584 = vcmp.gt.s32.totalorder 0, %v583
    %v585 = vsel %vm584, 0, %v583
    %v586 = vsub.s32 32, %v585
    %v587 = vshll.u32 %v578, %v585
    %v588 = vshrl.u32 %v570, %v586
    %v589 = vor.u32 %v587, %v588
    %v590 = vsub.s32 4294967266, %v585
    %v591 = vadd.s32 %v590, 127
    %v592 = vshll.u32 %v591, 23
    %v593 = vor.u32 4788187, %v592
    %v594 = vand.u32 2147483647, %v593
    %v596 = vcvt.s32.f32 %v589
    %v597 = vmul.f32 %v596, %v594
    %v598 = vxor.u32 %v597, 2147483648
    %v599 = vsel %vm516, %v598, %v597
    %v600 = vsub.s32 4, %v576
    %v601 = vsel %vm516, %v600, %v576
    %v602 = vsel %vm515, %v513, %v599
    %v603 = vsel %vm515, 0, %v601
    %v604 = vcosq.f32.pop %v602
    %v605 = vsinq.f32.pop %v602
    %vm606 = vweird.f32 %v513
    %v607 = vadd.s32 %v603, 3
    %v608 = vand.u32 %v607, 3
    %vm609 = vcmp.lt.s32.totalorder %v608, 2
    %vm610 = vcmp.eq.s32.totalorder %v608, 0
    %v611 = vxor.u32 %v605, 2147483648
    %v612 = vsel %vm610, %v604, %v611
    %vm613 = vcmp.eq.s32.totalorder %v608, 2
    %v614 = vxor.u32 %v604, 2147483648
    %v615 = vsel %vm613, %v614, %v605
    %v616 = vsel %vm609, %v612, %v615
    %v617 = vsel %vm606, nan, %v616
    %618 = vst [vmem:[#allocation7] sm:$0xf] %v617
    // Predicated region
    $region26: #{tpu_custom_call.1} parent=1 // pred_check
      _
    $region27: #{tpu_custom_call.1} parent=1 // pred_check_branch
      %620 = sbr.rel (0) target = $region29
    $region28: #{tpu_custom_call.1} parent=1 // pred_region
      %s622 = ssub.s32 64, 64
      %623 = vsyncadd [#allocation4], %s622
      %s625 = sshll.u32 [#allocation7], 4
      %s626 = int_to_ptr.vmem [resolvable:$true] %s625
      %628 = dma.vmem_to_hbm [thread:$0]  %s626, 64, %s4, [#allocation4]
    $region29: #{tpu_custom_call.1} parent=1 // pred_fallthru
      _
    // Predicated region
    $region30: #{tpu_custom_call.1} parent=1 // pred_check
      _
    $region31: #{tpu_custom_call.1} parent=1 // pred_check_branch
      %630 = sbr.rel (0) target = $region33
    $region32: #{tpu_custom_call.1} parent=1 // pred_region
      %631 = dma.done [#allocation4], 64
    $region33: #{tpu_custom_call.1} parent=1 // pred_fallthru
      _
    %632 = vsyncpa [#allocation3], 1
    %633 = vsyncpa [#allocation6], 1
    %634 = vsyncpa [#allocation4], 1

</llo_original>
